<compile_context>
chip_gen: v7x
topology: tpu7x:2x2x1
jax: 0.10.0
libtpu: 0.0.40
codegen_flags: <defaults>
</compile_context>

<pallas_src>
import functools

import jax
import jax.numpy as jnp
from jax.experimental import pallas as pl
from jax.experimental.pallas import tpu as pltpu

_LANES = 128


# ----------------------------- kernels --------------------------------------

def _rmsnorm_kernel(x_ref, g_ref, o_ref):
    # Plain path: x_ref (tile, C); g_ref (1, C) f32; o_ref (tile, C).
    x = x_ref[...].astype(jnp.float32)
    # Single fused reduction: E[x^2]  (RMSNorm: no mean subtraction, no bias).
    ms = jnp.mean(x * x, axis=-1, keepdims=True)
    inv = jax.lax.rsqrt(ms)  # EUP slot; no eps, matching the torch module
    o_ref[...] = (x * inv * g_ref[...]).astype(o_ref.dtype)


def _rmsnorm_packed_kernel(x_ref, g_ref, seg_ref, o_ref):
    # Lane-packed path for C < 128 with 128 % C == 0.
    #   x_ref : (tile, 128) -- each 128-lane row holds G = 128//C consecutive
    #           logical rows (free contiguous reshape in the wrapper).
    #   g_ref : (1, 128) f32 -- gain tiled G times across the lanes.
    #   seg_ref: (128, 128) f32 block-diagonal matrix with 1/C entries.
    # (x*x) @ seg computes mean(x^2) of every logical row and broadcasts it
    # back onto that row's C lanes -- a segmented reduce on the otherwise-idle
    # MXU, so the store stays lane-dense (unmasked vst) and nothing crosses
    # between logical rows.
    x = x_ref[...].astype(jnp.float32)
    ms = jnp.dot(x * x, seg_ref[...],
                 preferred_element_type=jnp.float32,
                 precision=jax.lax.Precision.HIGHEST)
    inv = jax.lax.rsqrt(ms)  # no eps (matches the torch module; 0-row -> NaN)
    o_ref[...] = (x * inv * g_ref[...]).astype(o_ref.dtype)


# --------------------------- tiling heuristics -------------------------------

@functools.lru_cache(maxsize=1)
def _hw_params():
    """Generation-aware VMEM / grid budgets.

    v7x: 64 MiB physical VMEM per TC and 2 TCs -> keep pipelined buffers
    <= ~18 MiB, vmem limit 44 MiB, and at least ~4 grid steps so both
    TensorCores get work. v5e/v6e: 128 MiB VMEM, single TC -> big tiles, only
    a >= 2-step floor (for DMA/compute pipelining).
    """
    vmem_cap = 128 * 1024 * 1024
    try:
        info = pltpu.get_tpu_info()
        vmem_cap = int(getattr(info, "vmem_capacity_bytes", vmem_cap))
    except Exception:
        pass
    if vmem_cap <= 80 * 1024 * 1024:  # v7x-class (64 MiB / TC)
        return dict(buffer_budget=18 * 1024 * 1024,
                    vmem_limit=44 * 1024 * 1024,
                    min_steps=4)
    return dict(buffer_budget=36 * 1024 * 1024,  # v5e / v6e (128 MiB)
                vmem_limit=80 * 1024 * 1024,
                min_steps=2)


def _pick_tile_rows(n_rows, n_cols, itemsize, buffer_budget, min_steps):
    """Largest sublane-aligned row tile fitting the per-generation VMEM budget,
    while keeping >= min_steps grid steps when there are enough rows."""
    # Sublane packing: 8 for f32, 16 for bf16, 32 for int8/fp8.
    pack = max(8, 32 // max(int(itemsize), 1))
    # Per element of one block:
    #   4 * itemsize : double-buffered input + output pipelined VMEM buffers
    #   ~12 B       : f32 temporaries live inside the kernel (upcast x, x*x /
    #                 ms, result before downcast) -- matters for bf16/fp8.
    bytes_per_elem = 4 * int(itemsize) + 12
    tile = buffer_budget // (bytes_per_elem * max(int(n_cols), 1))
    # Keep at least `min_steps` grid steps when rows allow (v7x: >= 2 per TC;
    # single-TC chips only need pipelining).
    tile = min(tile, pl.cdiv(int(n_rows), min_steps))
    # Round down to a sublane-aligned multiple, never below one packed sublane.
    tile = max(pack, (tile // pack) * pack)
    return int(tile)


# ------------------------------- wrapper -------------------------------------

@functools.partial(jax.jit, static_argnames=("tile_rows", "group", "vmem_limit"))
def _rms_norm_impl(x, gain, *, tile_rows, group, vmem_limit):
    orig_shape = x.shape
    C = orig_shape[-1]
    x2 = x.reshape(-1, C)
    N = x2.shape[0]
    gain_f32 = gain.reshape(C).astype(jnp.float32)

    params = pltpu.CompilerParams(
        # TODO(synk): verify in a profile that the 1-D "parallel" grid shards
        # across both v7x TensorCores; if not, switch to CORE_PARALLEL.
        dimension_semantics=("parallel",),
        vmem_limit_bytes=vmem_limit,
    )

    if group > 1:
        # Free contiguous view: pack `group` logical rows per 128-lane row.
        n_packed = N // group
        xp = x2.reshape(n_packed, _LANES)
        g = jnp.tile(gain_f32, (group,)).reshape(1, _LANES)
        # Block-diagonal segmented-mean matrix: seg[i, j] = 1/C iff i, j are in
        # the same C-lane group.
        row = jax.lax.broadcasted_iota(jnp.int32, (_LANES, _LANES), 0)
        col = jax.lax.broadcasted_iota(jnp.int32, (_LANES, _LANES), 1)
        seg = jnp.where(row // C == col // C,
                        jnp.float32(1.0 / C), jnp.float32(0.0))

        grid = (pl.cdiv(n_packed, tile_rows),)
        out = pl.pallas_call(
            _rmsnorm_packed_kernel,
            out_shape=jax.ShapeDtypeStruct((n_packed, _LANES), x.dtype),
            grid_spec=pltpu.PrefetchScalarGridSpec(
                num_scalar_prefetch=0,
                grid=grid,
                in_specs=[
                    pl.BlockSpec((tile_rows, _LANES), lambda i: (i, 0)),
                    # Constant block index -> gain / seg are not re-DMA'd.
                    pl.BlockSpec((1, _LANES), lambda i: (0, 0)),
                    pl.BlockSpec((_LANES, _LANES), lambda i: (0, 0)),
                ],
                out_specs=pl.BlockSpec((tile_rows, _LANES), lambda i: (i, 0)),
            ),
            compiler_params=params,
        )(xp, g, seg)
        return out.reshape(orig_shape)

    # Fallback (C >= 128, or C does not divide 128, or row count does not pack
    # evenly). Ragged last block: rows are independent and OOB rows are never
    # written back, so no host-side padding is needed (do NOT turn this into a
    # cross-row reduction).
    g = gain_f32.reshape(1, C)
    grid = (pl.cdiv(N, tile_rows),)
    out = pl.pallas_call(
        _rmsnorm_kernel,
        out_shape=jax.ShapeDtypeStruct((N, C), x.dtype),
        grid_spec=pltpu.PrefetchScalarGridSpec(
            num_scalar_prefetch=0,
            grid=grid,
            in_specs=[
                pl.BlockSpec((tile_rows, C), lambda i: (i, 0)),
                pl.BlockSpec((1, C), lambda i: (0, 0)),
            ],
            out_specs=pl.BlockSpec((tile_rows, C), lambda i: (i, 0)),
        ),
        compiler_params=params,
    )(x2, g)
    return out.reshape(orig_shape)


def rms_norm(x, gain, *, tile_rows=None):
    """RMSNorm over the last dimension of x (any leading shape), learned gain,
    no eps (matches the PyTorch module; an all-zero row yields NaN there too)."""
    C = int(x.shape[-1])
    N = 1
    for d in x.shape[:-1]:
        N *= int(d)

    # Lane-dense packing when C divides 128 and the packed view is exact.
    group = 1
    if C < _LANES and _LANES % C == 0 and N % (_LANES // C) == 0:
        group = _LANES // C

    hw = _hw_params()
    n_rows = N // group
    n_cols = C * group
    tile = tile_rows if tile_rows is not None else _pick_tile_rows(
        n_rows, n_cols, jnp.dtype(x.dtype).itemsize,
        hw["buffer_budget"], hw["min_steps"])

    return _rms_norm_impl(x, gain, tile_rows=tile, group=group,
                          vmem_limit=hw["vmem_limit"])


# ------------------------------- self-test -----------------------------------

def _reference(x, gain):
    # rms = ||x||_2 / sqrt(C);  y = x / rms * gain
    c = x.shape[-1]
    rms = jnp.linalg.norm(x.astype(jnp.float32), axis=-1, keepdims=True)
    rms = rms / jnp.sqrt(jnp.float32(c))
    return (x.astype(jnp.float32) / rms) * gain.astype(jnp.float32)


if __name__ == "__main__":
    key = jax.random.PRNGKey(0)

    # Primary case, matching the module spec: config.n_embd = 32 (packed path).
    B, T, C = 2, 8, 32
    k0, k1, k2 = jax.random.split(key, 3)
    x = jax.random.normal(k0, (B, T, C), dtype=jnp.float32)
    gain = jnp.ones((C,), jnp.float32)
    y = rms_norm(x, gain)
    jax.block_until_ready(y)
    assert y.shape == x.shape and y.dtype == x.dtype
    assert jnp.max(jnp.abs(y.astype(jnp.float32) - _reference(x, gain))) < 2e-3

    # Lane-dense-already case (C = 128, plain path).
    x128 = jax.random.normal(k1, (3, 5, 128), dtype=jnp.float32)
    g128 = 0.5 + jax.random.uniform(k2, (128,), dtype=jnp.float32)
    y128 = rms_norm(x128, g128)
    jax.block_until_ready(y128)
    assert jnp.max(jnp.abs(y128 - _reference(x128, g128))) < 2e-3

    # Fallback case (C = 48 does not divide 128 -> plain path, masked stores).
    x48 = jax.random.normal(k1, (4, 48), dtype=jnp.float32)
    g48 = jnp.ones((48,), jnp.float32)
    y48 = rms_norm(x48, g48)
    jax.block_until_ready(y48)
    assert jnp.max(jnp.abs(y48 - _reference(x48, g48))) < 2e-3

    print("KERNEL_OK")
</pallas_src>

<mosaic_0001>
module attributes {stable_mosaic.version = 11 : i64} {
  func.func @_rmsnorm_packed_kernel(%arg0: i32, %arg1: memref<8x128xf32, #tpu.memory_space<vmem>>, %arg2: memref<1x128xf32, #tpu.memory_space<vmem>>, %arg3: memref<128x128xf32, #tpu.memory_space<vmem>>, %arg4: memref<8x128xf32, #tpu.memory_space<vmem>>) attributes {dimension_semantics = [#tpu.dimension_semantics<parallel>], iteration_bounds = array<i64: 1>, scalar_prefetch = 0 : i64, scratch_operands = 0 : i64, tpu.core_type = #tpu.core_type<tc>, window_params = [{transform_indices = @transform_0, window_bounds = array<i64: 8, 128>}, {pipeline_mode = #tpu.pipeline_mode<synchronous>, transform_indices = @transform_1, window_bounds = array<i64: 1, 128>}, {pipeline_mode = #tpu.pipeline_mode<synchronous>, transform_indices = @transform_2, window_bounds = array<i64: 128, 128>}, {transform_indices = @transform_3, window_bounds = array<i64: 8, 128>}]} {
    %c0 = arith.constant 0 : index
    %c0_0 = arith.constant 0 : index
    %0 = vector.load %arg1[%c0, %c0_0] : memref<8x128xf32, #tpu.memory_space<vmem>>, vector<8x128xf32>
    %1 = arith.mulf %0, %0 : vector<8x128xf32>
    %c0_1 = arith.constant 0 : index
    %c0_2 = arith.constant 0 : index
    %2 = vector.load %arg3[%c0_1, %c0_2] : memref<128x128xf32, #tpu.memory_space<vmem>>, vector<128x128xf32>
    %cst = arith.constant dense<0.000000e+00> : vector<8x128xf32>
    %3 = tpu.matmul %1, %2, %cst {dimension_numbers = #tpu.dot_dimension_numbers<[1], [0], [0], [1], [0, 0, 1, 1], [], []>, precision = #tpu.contract_precision<fp32>} : vector<8x128xf32>, vector<128x128xf32>, vector<8x128xf32> -> vector<8x128xf32>
    %4 = math.rsqrt %3 : vector<8x128xf32>
    %5 = arith.mulf %0, %4 : vector<8x128xf32>
    %c0_3 = arith.constant 0 : index
    %c0_4 = arith.constant 0 : index
    %6 = vector.load %arg2[%c0_3, %c0_4] : memref<1x128xf32, #tpu.memory_space<vmem>>, vector<1x128xf32>
    %7 = vector.broadcast %6 : vector<1x128xf32> to vector<8x128xf32>
    %8 = arith.mulf %5, %7 : vector<8x128xf32>
    %c0_5 = arith.constant 0 : index
    %c0_6 = arith.constant 0 : index
    %9 = vector.load %arg4[%c0_5, %c0_6] : memref<8x128xf32, #tpu.memory_space<vmem>>, vector<8x128xf32>
    tpu.vector_store %arg4[%c0_5, %c0_6], %8 {strides = array<i32>} : memref<8x128xf32, #tpu.memory_space<vmem>>, vector<8x128xf32>,
    return
  }
  func.func @transform_0(%arg0: i32) -> (i32, i32) {
    %c0_i32 = arith.constant 0 : i32
    %c0_i32_0 = arith.constant 0 : i32
    return %arg0, %c0_i32 : i32, i32
  }
  func.func @transform_1(%arg0: i32) -> (i32, i32) {
    %c0_i32 = arith.constant 0 : i32
    %c0_i32_0 = arith.constant 0 : i32
    %c0_i32_1 = arith.constant 0 : i32
    return %c0_i32, %c0_i32_0 : i32, i32
  }
  func.func @transform_2(%arg0: i32) -> (i32, i32) {
    %c0_i32 = arith.constant 0 : i32
    %c0_i32_0 = arith.constant 0 : i32
    %c0_i32_1 = arith.constant 0 : i32
    return %c0_i32, %c0_i32_0 : i32, i32
  }
  func.func @transform_3(%arg0: i32) -> (i32, i32) {
    %c0_i32 = arith.constant 0 : i32
    %c0_i32_0 = arith.constant 0 : i32
    return %arg0, %c0_i32 : i32, i32
  }
}

</mosaic_0001>

<llo_original>
// kernel: tile.8
$region0: #{tile.8}
  #allocation0 [shape = 's32[1]{0}', space=sflag, size = 0x4, scoped, tag = 'scoped memory for tile.8']
  %s0 = inlined_call_operand.vmem [shape: f32[32], index: 0, kind: input, shape index: {}]
  %s1 = inlined_call_operand.vmem [shape: f32[4,32], index: 1, kind: output, shape index: {}]
  // Predicated region
  $region2: #{tile.8} parent=0 // pred_check
    _
  $region3: #{tile.8} parent=0 // pred_check_branch
    %3 = sbr.rel (0) target = $region5
  $region4: #{tile.8} parent=0 // pred_region
    _
  $region5: #{tile.8} parent=0 // pred_fallthru
    _
  %v4 = vld [vmem:[%s0] ss:$0 sm:$0xff]
  %5 = vst [vmem:[%s1] sm:$0xf] %v4

// kernel: tile.9
$region0: #{tile.9}
  %s0 = inlined_call_operand.vmem [shape: f32[4,32], index: 0, kind: input, shape index: {}]
  %s1 = inlined_call_operand.hbm [shape: f32[1,128], index: 1, kind: output, shape index: {}]
  $region1: #{tile.9} parent=0
    #allocation0 [shape = 'u8[512]{0}', space=vmem, size = 0x400, scoped, tag = 'operand span for operand 1']
    #allocation1 [shape = 's32[1]{0}', space=sflag, size = 0x4, scoped, tag = 'scoped memory for tile.9']
    #allocation2 [shape = 'u8[4096]{0}', space=vmem, size = 0x1000, scoped, tag = 'scoped mem for output reshape']
    #allocation3 [shape = 'u8[4096]{0}', space=vmem, size = 0x1000, scoped, tag = 'scoped mem for input reshape']
    %2 = vsyncpa [#allocation1], 0
    %s4 = sshllo.u32 0, 4
    %v5 = vld [vmem:[%s0] sm:%s4]
    %6 = vst [vmem:[#allocation3] sm:%s4] %v5
    %v7 = vld [vmem:[#allocation3] sm:$0x1]
    %vm8 = vcmask 261120
    %9 = vst.msk [vmem:[#allocation2] sm:$0x1] %vm8, %v7
    %s10 = scalar_lea.vmem [#allocation3], 3
    %v11 = vld [vmem:[%s10] sm:$0x1]
    %12 = vrot.lane.b32.xlu0 %v11, 96
    %v13 = vpop.permute.xlu0 %12
    %vm14 = vcmask 1048320
    %15 = vst.msk [vmem:[#allocation2] sm:$0x1] %vm14, %v13
    %s16 = scalar_lea.vmem [#allocation3], 2
    %v17 = vld [vmem:[%s16] sm:$0x1]
    %18 = vrot.lane.b32.xlu0 %v17, 64
    %v19 = vpop.permute.xlu0 %18
    %vm20 = vcmask 785920
    %21 = vst.msk [vmem:[#allocation2] sm:$0x1] %vm20, %v19
    %s22 = scalar_lea.vmem [#allocation3], 1
    %v23 = vld [vmem:[%s22] sm:$0x1]
    %24 = vrot.lane.b32.xlu0 %v23, 32
    %v25 = vpop.permute.xlu0 %24
    %vm26 = vcmask 523520
    %27 = vst.msk [vmem:[#allocation2] sm:$0x1] %vm26, %v25
    %s29 = sshllo.u32 0, 1
    %v31 = vld [vmem:[#allocation2] sm:%s29]
    %s32 = sshllo.u32 0, 1
    %33 = vst [vmem:[#allocation0] sm:%s32] %v31
    %s35 = ssub.s32 16, 16
    %36 = vsyncadd [#allocation1], %s35
    %s38 = sshll.u32 [#allocation0], 4
    %s39 = int_to_ptr.vmem [resolvable:$true] %s38
    %41 = dma.vmem_to_hbm [thread:$0]  %s39, 16, %s1, [#allocation1]
    %42 = dma.done [#allocation1], 16
    %43 = vsyncpa [#allocation1], 1

// kernel: _rms_norm_impl.1
$region0: #{_rms_norm_impl.1}
  #allocation0 [shape = 'u32[]', space=smem, size = 0x4, offset = 0x4, fixed_abs, tag = 'smem constant byte address 0x4 - core index']
  #allocation1 [shape = 'u32[144,128]{1,0:T(1,128)}', space=vmem, size = 0x12000, scoped, tag = 'internal scratch']
  %s0 = inlined_call_operand.hbm [shape: f32[4,128], index: 0, kind: input, shape index: {}]
  %s1 = inlined_call_operand.hbm [shape: f32[1,128], index: 1, kind: input, shape index: {}]
  %s2 = inlined_call_operand.hbm [shape: f32[128,128], index: 2, kind: input, shape index: {}]
  %s3 = inlined_call_operand.hbm [shape: f32[4,128], index: 3, kind: output, shape index: {}]
  %s4 = sld [smem:[#allocation0]]
  $region34: #{_rms_norm_impl.1} parent=0
    _
  %s6 = ssub.s32 1, %s4
  %s7 = scalar_select 0, %s6, %s4
  $region1: #{_rms_norm_impl.1} parent=0
    #allocation2 [shape = 'u8[4096]{0}', space=vmem, size = 0x1000, scoped, tag = 'input window, operand 0, single buffered']
    #allocation3 [shape = 's32[1]{0}', space=sflag, size = 0x4, scoped, tag = 'scoped memory for _rms_norm_impl.1']
    #allocation4 [shape = 's32[1]{0}', space=sflag, size = 0x4, scoped, tag = 'scoped memory for _rms_norm_impl.1']
    #allocation5 [shape = 'u8[512]{0}', space=vmem, size = 0x400, scoped, tag = 'input window, operand 1, single buffered']
    #allocation6 [shape = 's32[1]{0}', space=sflag, size = 0x4, scoped, tag = 'scoped memory for _rms_norm_impl.1']
    #allocation7 [shape = 'u8[65536]{0}', space=vmem, size = 0x10000, scoped, tag = 'input window, operand 2, single buffered']
    #allocation8 [shape = 'u8[4096]{0}', space=vmem, size = 0x1000, scoped, tag = 'output window, operand 0, single buffered']
    %8 = vsyncpa [#allocation3], 0
    %9 = vsyncpa [#allocation6], 0
    %10 = vsyncpa [#allocation4], 0
    // Predicated region
    $region2: #{_rms_norm_impl.1} parent=1 // pred_check
      _
    $region3: #{_rms_norm_impl.1} parent=1 // pred_check_branch
      %12 = sbr.rel (0) target = $region5
    $region4: #{_rms_norm_impl.1} parent=1 // pred_region
      %s14 = ssub.s32 128, 64
      %15 = vsyncadd [#allocation3], %s14
      %s16 = sshll.u32 [#allocation2], 4
      %s17 = int_to_ptr.vmem [resolvable:$true] %s16
      %22 = dma.hbm_to_vmem [thread:$0]  %s0, 64, %s17, [#allocation3], 64, 64, 4
    $region5: #{_rms_norm_impl.1} parent=1 // pred_fallthru
      _
    // Predicated region
    $region6: #{_rms_norm_impl.1} parent=1 // pred_check
      _
    $region7: #{_rms_norm_impl.1} parent=1 // pred_check_branch
      %24 = sbr.rel (0) target = $region9
    $region8: #{_rms_norm_impl.1} parent=1 // pred_region
      %s26 = ssub.s32 16, 16
      %27 = vsyncadd [#allocation6], %s26
      %s29 = sshll.u32 [#allocation5], 4
      %s30 = int_to_ptr.vmem [resolvable:$true] %s29
      %32 = dma.hbm_to_vmem [thread:$0]  %s1, 16, %s30, [#allocation6]
    $region9: #{_rms_norm_impl.1} parent=1 // pred_fallthru
      _
    // Predicated region
    $region10: #{_rms_norm_impl.1} parent=1 // pred_check
      _
    $region11: #{_rms_norm_impl.1} parent=1 // pred_check_branch
      %34 = sbr.rel (0) target = $region13
    $region12: #{_rms_norm_impl.1} parent=1 // pred_region
      %s36 = ssub.s32 2048, 2048
      %37 = vsyncadd [#allocation6], %s36
      %s38 = sshll.u32 [#allocation7], 4
      %s39 = int_to_ptr.vmem [resolvable:$true] %s38
      %44 = dma.hbm_to_vmem [thread:$0]  %s2, 2048, %s39, [#allocation6], 128, 128, 8
    $region13: #{_rms_norm_impl.1} parent=1 // pred_fallthru
      _
    // Predicated region
    $region14: #{_rms_norm_impl.1} parent=1 // pred_check
      _
    $region15: #{_rms_norm_impl.1} parent=1 // pred_check_branch
      %46 = sbr.rel (0) target = $region17
    $region16: #{_rms_norm_impl.1} parent=1 // pred_region
      %47 = dma.done [#allocation3], 128
    $region17: #{_rms_norm_impl.1} parent=1 // pred_fallthru
      _
    // Predicated region
    $region18: #{_rms_norm_impl.1} parent=1 // pred_check
      _
    $region19: #{_rms_norm_impl.1} parent=1 // pred_check_branch
      %49 = sbr.rel (0) target = $region21
    $region20: #{_rms_norm_impl.1} parent=1 // pred_region
      %50 = dma.done [#allocation6], 16
    $region21: #{_rms_norm_impl.1} parent=1 // pred_fallthru
      _
    // Predicated region
    $region22: #{_rms_norm_impl.1} parent=1 // pred_check
      _
    $region23: #{_rms_norm_impl.1} parent=1 // pred_check_branch
      %52 = sbr.rel (0) target = $region25
    $region24: #{_rms_norm_impl.1} parent=1 // pred_region
      %53 = dma.done [#allocation6], 2048
    $region25: #{_rms_norm_impl.1} parent=1 // pred_fallthru
      _
    %v54 = vld [vmem:[#allocation2] sm:$0xff]
    %v55 = vmul.f32 %v54, %v54
    %v56 = vld [vmem:[#allocation7] sm:$0xff]
    %v57 = vld [vmem:[#allocation7 + $0x8] sm:$0xff]
    %v58 = vld [vmem:[#allocation7 + $0x10] sm:$0xff]
    %v59 = vld [vmem:[#allocation7 + $0x18] sm:$0xff]
    %v60 = vld [vmem:[#allocation7 + $0x20] sm:$0xff]
    %v61 = vld [vmem:[#allocation7 + $0x28] sm:$0xff]
    %v62 = vld [vmem:[#allocation7 + $0x30] sm:$0xff]
    %v63 = vld [vmem:[#allocation7 + $0x38] sm:$0xff]
    %v64 = vld [vmem:[#allocation7 + $0x40] sm:$0xff]
    %v65 = vld [vmem:[#allocation7 + $0x48] sm:$0xff]
    %v66 = vld [vmem:[#allocation7 + $0x50] sm:$0xff]
    %v67 = vld [vmem:[#allocation7 + $0x58] sm:$0xff]
    %v68 = vld [vmem:[#allocation7 + $0x60] sm:$0xff]
    %v69 = vld [vmem:[#allocation7 + $0x68] sm:$0xff]
    %v70 = vld [vmem:[#allocation7 + $0x70] sm:$0xff]
    %v71 = vld [vmem:[#allocation7 + $0x78] sm:$0xff]
    %72 = vmatprep.subr.mxu0 0.0
    %v73 = vand.u32 %v56, 4294901760
    %74 = vmatpush1.msra.mxu0 %v73
    %75 = vmatprep.subr.mxu0 0.0
    %v76 = vand.u32 %v57, 4294901760
    %77 = vmatpush1.msra.mxu0 %v76
    %78 = vmatprep.subr.mxu0 0.0
    %v79 = vand.u32 %v58, 4294901760
    %80 = vmatpush1.msra.mxu0 %v79
    %81 = vmatprep.subr.mxu0 0.0
    %v82 = vand.u32 %v59, 4294901760
    %83 = vmatpush1.msra.mxu0 %v82
    %84 = vmatprep.subr.mxu0 0.0
    %v85 = vand.u32 %v60, 4294901760
    %86 = vmatpush1.msra.mxu0 %v85
    %87 = vmatprep.subr.mxu0 0.0
    %v88 = vand.u32 %v61, 4294901760
    %89 = vmatpush1.msra.mxu0 %v88
    %90 = vmatprep.subr.mxu0 0.0
    %v91 = vand.u32 %v62, 4294901760
    %92 = vmatpush1.msra.mxu0 %v91
    %93 = vmatprep.subr.mxu0 0.0
    %v94 = vand.u32 %v63, 4294901760
    %95 = vmatpush1.msra.mxu0 %v94
    %96 = vmatprep.subr.mxu0 0.0
    %v97 = vand.u32 %v64, 4294901760
    %98 = vmatpush1.msra.mxu0 %v97
    %99 = vmatprep.subr.mxu0 0.0
    %v100 = vand.u32 %v65, 4294901760
    %101 = vmatpush1.msra.mxu0 %v100
    %102 = vmatprep.subr.mxu0 0.0
    %v103 = vand.u32 %v66, 4294901760
    %104 = vmatpush1.msra.mxu0 %v103
    %105 = vmatprep.subr.mxu0 0.0
    %v106 = vand.u32 %v67, 4294901760
    %107 = vmatpush1.msra.mxu0 %v106
    %108 = vmatprep.subr.mxu0 0.0
    %v109 = vand.u32 %v68, 4294901760
    %110 = vmatpush1.msra.mxu0 %v109
    %111 = vmatprep.subr.mxu0 0.0
    %v112 = vand.u32 %v69, 4294901760
    %113 = vmatpush1.msra.mxu0 %v112
    %114 = vmatprep.subr.mxu0 0.0
    %v115 = vand.u32 %v70, 4294901760
    %116 = vmatpush1.msra.mxu0 %v115
    %117 = vmatprep.subr.mxu0 0.0
    %v118 = vand.u32 %v71, 4294901760
    %119 = vmatpush1.msra.mxu0 %v118
    %120 = vmatprep.subr.mxu0 0.0
    %121 = vmatpush1.msra.mxu0 0.0
    %122 = vmatprep.subr.mxu0 0.0
    %123 = vmatpush1.msra.mxu0 0.0
    %124 = vmatprep.subr.mxu0 0.0
    %125 = vmatpush1.msra.mxu0 0.0
    %126 = vmatprep.subr.mxu0 0.0
    %127 = vmatpush1.msra.mxu0 0.0
    %128 = vmatprep.subr.mxu0 0.0
    %129 = vmatpush1.msra.mxu0 0.0
    %130 = vmatprep.subr.mxu0 0.0
    %131 = vmatpush1.msra.mxu0 0.0
    %132 = vmatprep.subr.mxu0 0.0
    %133 = vmatpush1.msra.mxu0 0.0
    %134 = vmatprep.subr.mxu0 0.0
    %135 = vmatpush1.msra.mxu0 0.0
    %136 = vmatprep.subr.mxu0 0.0
    %137 = vmatpush1.msra.mxu0 0.0
    %138 = vmatprep.subr.mxu0 0.0
    %139 = vmatpush1.msra.mxu0 0.0
    %140 = vmatprep.subr.mxu0 0.0
    %141 = vmatpush1.msra.mxu0 0.0
    %142 = vmatprep.subr.mxu0 0.0
    %143 = vmatpush1.msra.mxu0 0.0
    %144 = vmatprep.subr.mxu0 0.0
    %145 = vmatpush1.msra.mxu0 0.0
    %146 = vmatprep.subr.mxu0 0.0
    %147 = vmatpush1.msra.mxu0 0.0
    %148 = vmatprep.subr.mxu0 0.0
    %149 = vmatpush1.msra.mxu0 0.0
    %150 = vmatprep.subr.mxu0 0.0
    %151 = vmatpush1.msra.mxu0 0.0
    %152 = vmatprep.mubr.f32.mxu0 0.0
    %v153 = vand.u32 %v55, 4294901760
    %v154 = vsub.f32 %v55, %v153
    %v155 = vand.u32 %v154, 4294901760
    %v156 = vsub.f32 %v154, %v155
    %v157 = vand.u32 %v156, 4294901760
    %158 = vmatmul.mubr.f32.gmra.mrb[0].mxu0 %v157
    %v159 = vpop.f32.mrb[0].mxu0
    %v160 = vadd.f32 0.0, %v159
    %v161 = vpop.f32.mrb[0].mxu0
    %162 = vdwg.mxu0
    %163 = vmatprep.subr.mxu0 0.0
    %v164 = vand.u32 %v56, 4294901760
    %v165 = vsub.f32 %v56, %v164
    %v166 = vand.u32 %v165, 4294901760
    %v167 = vsub.f32 %v165, %v166
    %v168 = vand.u32 %v167, 4294901760
    %169 = vmatpush1.msra.mxu0 %v168
    %170 = vmatprep.subr.mxu0 0.0
    %v171 = vand.u32 %v57, 4294901760
    %v172 = vsub.f32 %v57, %v171
    %v173 = vand.u32 %v172, 4294901760
    %v174 = vsub.f32 %v172, %v173
    %v175 = vand.u32 %v174, 4294901760
    %176 = vmatpush1.msra.mxu0 %v175
    %177 = vmatprep.subr.mxu0 0.0
    %v178 = vand.u32 %v58, 4294901760
    %v179 = vsub.f32 %v58, %v178
    %v180 = vand.u32 %v179, 4294901760
    %v181 = vsub.f32 %v179, %v180
    %v182 = vand.u32 %v181, 4294901760
    %183 = vmatpush1.msra.mxu0 %v182
    %184 = vmatprep.subr.mxu0 0.0
    %v185 = vand.u32 %v59, 4294901760
    %v186 = vsub.f32 %v59, %v185
    %v187 = vand.u32 %v186, 4294901760
    %v188 = vsub.f32 %v186, %v187
    %v189 = vand.u32 %v188, 4294901760
    %190 = vmatpush1.msra.mxu0 %v189
    %191 = vmatprep.subr.mxu0 0.0
    %v192 = vand.u32 %v60, 4294901760
    %v193 = vsub.f32 %v60, %v192
    %v194 = vand.u32 %v193, 4294901760
    %v195 = vsub.f32 %v193, %v194
    %v196 = vand.u32 %v195, 4294901760
    %197 = vmatpush1.msra.mxu0 %v196
    %198 = vmatprep.subr.mxu0 0.0
    %v199 = vand.u32 %v61, 4294901760
    %v200 = vsub.f32 %v61, %v199
    %v201 = vand.u32 %v200, 4294901760
    %v202 = vsub.f32 %v200, %v201
    %v203 = vand.u32 %v202, 4294901760
    %204 = vmatpush1.msra.mxu0 %v203
    %205 = vmatprep.subr.mxu0 0.0
    %v206 = vand.u32 %v62, 4294901760
    %v207 = vsub.f32 %v62, %v206
    %v208 = vand.u32 %v207, 4294901760
    %v209 = vsub.f32 %v207, %v208
    %v210 = vand.u32 %v209, 4294901760
    %211 = vmatpush1.msra.mxu0 %v210
    %212 = vmatprep.subr.mxu0 0.0
    %v213 = vand.u32 %v63, 4294901760
    %v214 = vsub.f32 %v63, %v213
    %v215 = vand.u32 %v214, 4294901760
    %v216 = vsub.f32 %v214, %v215
    %v217 = vand.u32 %v216, 4294901760
    %218 = vmatpush1.msra.mxu0 %v217
    %219 = vmatprep.subr.mxu0 0.0
    %v220 = vand.u32 %v64, 4294901760
    %v221 = vsub.f32 %v64, %v220
    %v222 = vand.u32 %v221, 4294901760
    %v223 = vsub.f32 %v221, %v222
    %v224 = vand.u32 %v223, 4294901760
    %225 = vmatpush1.msra.mxu0 %v224
    %226 = vmatprep.subr.mxu0 0.0
    %v227 = vand.u32 %v65, 4294901760
    %v228 = vsub.f32 %v65, %v227
    %v229 = vand.u32 %v228, 4294901760
    %v230 = vsub.f32 %v228, %v229
    %v231 = vand.u32 %v230, 4294901760
    %232 = vmatpush1.msra.mxu0 %v231
    %233 = vmatprep.subr.mxu0 0.0
    %v234 = vand.u32 %v66, 4294901760
    %v235 = vsub.f32 %v66, %v234
    %v236 = vand.u32 %v235, 4294901760
    %v237 = vsub.f32 %v235, %v236
    %v238 = vand.u32 %v237, 4294901760
    %239 = vmatpush1.msra.mxu0 %v238
    %240 = vmatprep.subr.mxu0 0.0
    %v241 = vand.u32 %v67, 4294901760
    %v242 = vsub.f32 %v67, %v241
    %v243 = vand.u32 %v242, 4294901760
    %v244 = vsub.f32 %v242, %v243
    %v245 = vand.u32 %v244, 4294901760
    %246 = vmatpush1.msra.mxu0 %v245
    %247 = vmatprep.subr.mxu0 0.0
    %v248 = vand.u32 %v68, 4294901760
    %v249 = vsub.f32 %v68, %v248
    %v250 = vand.u32 %v249, 4294901760
    %v251 = vsub.f32 %v249, %v250
    %v252 = vand.u32 %v251, 4294901760
    %253 = vmatpush1.msra.mxu0 %v252
    %254 = vmatprep.subr.mxu0 0.0
    %v255 = vand.u32 %v69, 4294901760
    %v256 = vsub.f32 %v69, %v255
    %v257 = vand.u32 %v256, 4294901760
    %v258 = vsub.f32 %v256, %v257
    %v259 = vand.u32 %v258, 4294901760
    %260 = vmatpush1.msra.mxu0 %v259
    %261 = vmatprep.subr.mxu0 0.0
    %v262 = vand.u32 %v70, 4294901760
    %v263 = vsub.f32 %v70, %v262
    %v264 = vand.u32 %v263, 4294901760
    %v265 = vsub.f32 %v263, %v264
    %v266 = vand.u32 %v265, 4294901760
    %267 = vmatpush1.msra.mxu0 %v266
    %268 = vmatprep.subr.mxu0 0.0
    %v269 = vand.u32 %v71, 4294901760
    %v270 = vsub.f32 %v71, %v269
    %v271 = vand.u32 %v270, 4294901760
    %v272 = vsub.f32 %v270, %v271
    %v273 = vand.u32 %v272, 4294901760
    %274 = vmatpush1.msra.mxu0 %v273
    %275 = vmatprep.subr.mxu0 0.0
    %276 = vmatpush1.msra.mxu0 0.0
    %277 = vmatprep.subr.mxu0 0.0
    %278 = vmatpush1.msra.mxu0 0.0
    %279 = vmatprep.subr.mxu0 0.0
    %280 = vmatpush1.msra.mxu0 0.0
    %281 = vmatprep.subr.mxu0 0.0
    %282 = vmatpush1.msra.mxu0 0.0
    %283 = vmatprep.subr.mxu0 0.0
    %284 = vmatpush1.msra.mxu0 0.0
    %285 = vmatprep.subr.mxu0 0.0
    %286 = vmatpush1.msra.mxu0 0.0
    %287 = vmatprep.subr.mxu0 0.0
    %288 = vmatpush1.msra.mxu0 0.0
    %289 = vmatprep.subr.mxu0 0.0
    %290 = vmatpush1.msra.mxu0 0.0
    %291 = vmatprep.subr.mxu0 0.0
    %292 = vmatpush1.msra.mxu0 0.0
    %293 = vmatprep.subr.mxu0 0.0
    %294 = vmatpush1.msra.mxu0 0.0
    %295 = vmatprep.subr.mxu0 0.0
    %296 = vmatpush1.msra.mxu0 0.0
    %297 = vmatprep.subr.mxu0 0.0
    %298 = vmatpush1.msra.mxu0 0.0
    %299 = vmatprep.subr.mxu0 0.0
    %300 = vmatpush1.msra.mxu0 0.0
    %301 = vmatprep.subr.mxu0 0.0
    %302 = vmatpush1.msra.mxu0 0.0
    %303 = vmatprep.subr.mxu0 0.0
    %304 = vmatpush1.msra.mxu0 0.0
    %305 = vmatprep.subr.mxu0 0.0
    %306 = vmatpush1.msra.mxu0 0.0
    %307 = vmatprep.mubr.f32.mxu0 0.0
    %v308 = vand.u32 %v55, 4294901760
    %309 = vmatmul.mubr.f32.gmra.mrb[0].mxu0 %v308
    %v310 = vpop.f32.mrb[0].mxu0
    %v311 = vadd.f32 %v160, %v310
    %v312 = vpop.f32.mrb[0].mxu0
    %313 = vdwg.mxu0
    %314 = vmatprep.subr.mxu0 0.0
    %v315 = vand.u32 %v56, 4294901760
    %v316 = vsub.f32 %v56, %v315
    %317 = vmatpush1.msra.mxu0 %v316
    %318 = vmatprep.subr.mxu0 0.0
    %v319 = vand.u32 %v57, 4294901760
    %v320 = vsub.f32 %v57, %v319
    %321 = vmatpush1.msra.mxu0 %v320
    %322 = vmatprep.subr.mxu0 0.0
    %v323 = vand.u32 %v58, 4294901760
    %v324 = vsub.f32 %v58, %v323
    %325 = vmatpush1.msra.mxu0 %v324
    %326 = vmatprep.subr.mxu0 0.0
    %v327 = vand.u32 %v59, 4294901760
    %v328 = vsub.f32 %v59, %v327
    %329 = vmatpush1.msra.mxu0 %v328
    %330 = vmatprep.subr.mxu0 0.0
    %v331 = vand.u32 %v60, 4294901760
    %v332 = vsub.f32 %v60, %v331
    %333 = vmatpush1.msra.mxu0 %v332
    %334 = vmatprep.subr.mxu0 0.0
    %v335 = vand.u32 %v61, 4294901760
    %v336 = vsub.f32 %v61, %v335
    %337 = vmatpush1.msra.mxu0 %v336
    %338 = vmatprep.subr.mxu0 0.0
    %v339 = vand.u32 %v62, 4294901760
    %v340 = vsub.f32 %v62, %v339
    %341 = vmatpush1.msra.mxu0 %v340
    %342 = vmatprep.subr.mxu0 0.0
    %v343 = vand.u32 %v63, 4294901760
    %v344 = vsub.f32 %v63, %v343
    %345 = vmatpush1.msra.mxu0 %v344
    %346 = vmatprep.subr.mxu0 0.0
    %v347 = vand.u32 %v64, 4294901760
    %v348 = vsub.f32 %v64, %v347
    %349 = vmatpush1.msra.mxu0 %v348
    %350 = vmatprep.subr.mxu0 0.0
    %v351 = vand.u32 %v65, 4294901760
    %v352 = vsub.f32 %v65, %v351
    %353 = vmatpush1.msra.mxu0 %v352
    %354 = vmatprep.subr.mxu0 0.0
    %v355 = vand.u32 %v66, 4294901760
    %v356 = vsub.f32 %v66, %v355
    %357 = vmatpush1.msra.mxu0 %v356
    %358 = vmatprep.subr.mxu0 0.0
    %v359 = vand.u32 %v67, 4294901760
    %v360 = vsub.f32 %v67, %v359
    %361 = vmatpush1.msra.mxu0 %v360
    %362 = vmatprep.subr.mxu0 0.0
    %v363 = vand.u32 %v68, 4294901760
    %v364 = vsub.f32 %v68, %v363
    %365 = vmatpush1.msra.mxu0 %v364
    %366 = vmatprep.subr.mxu0 0.0
    %v367 = vand.u32 %v69, 4294901760
    %v368 = vsub.f32 %v69, %v367
    %369 = vmatpush1.msra.mxu0 %v368
    %370 = vmatprep.subr.mxu0 0.0
    %v371 = vand.u32 %v70, 4294901760
    %v372 = vsub.f32 %v70, %v371
    %373 = vmatpush1.msra.mxu0 %v372
    %374 = vmatprep.subr.mxu0 0.0
    %v375 = vand.u32 %v71, 4294901760
    %v376 = vsub.f32 %v71, %v375
    %377 = vmatpush1.msra.mxu0 %v376
    %378 = vmatprep.subr.mxu0 0.0
    %379 = vmatpush1.msra.mxu0 0.0
    %380 = vmatprep.subr.mxu0 0.0
    %381 = vmatpush1.msra.mxu0 0.0
    %382 = vmatprep.subr.mxu0 0.0
    %383 = vmatpush1.msra.mxu0 0.0
    %384 = vmatprep.subr.mxu0 0.0
    %385 = vmatpush1.msra.mxu0 0.0
    %386 = vmatprep.subr.mxu0 0.0
    %387 = vmatpush1.msra.mxu0 0.0
    %388 = vmatprep.subr.mxu0 0.0
    %389 = vmatpush1.msra.mxu0 0.0
    %390 = vmatprep.subr.mxu0 0.0
    %391 = vmatpush1.msra.mxu0 0.0
    %392 = vmatprep.subr.mxu0 0.0
    %393 = vmatpush1.msra.mxu0 0.0
    %394 = vmatprep.subr.mxu0 0.0
    %395 = vmatpush1.msra.mxu0 0.0
    %396 = vmatprep.subr.mxu0 0.0
    %397 = vmatpush1.msra.mxu0 0.0
    %398 = vmatprep.subr.mxu0 0.0
    %399 = vmatpush1.msra.mxu0 0.0
    %400 = vmatprep.subr.mxu0 0.0
    %401 = vmatpush1.msra.mxu0 0.0
    %402 = vmatprep.subr.mxu0 0.0
    %403 = vmatpush1.msra.mxu0 0.0
    %404 = vmatprep.subr.mxu0 0.0
    %405 = vmatpush1.msra.mxu0 0.0
    %406 = vmatprep.subr.mxu0 0.0
    %407 = vmatpush1.msra.mxu0 0.0
    %408 = vmatprep.subr.mxu0 0.0
    %409 = vmatpush1.msra.mxu0 0.0
    %410 = vmatprep.mubr.f32.mxu0 0.0
    %v411 = vand.u32 %v55, 4294901760
    %v412 = vsub.f32 %v55, %v411
    %413 = vmatmul.mubr.f32.gmra.mrb[0].mxu0 %v412
    %v414 = vpop.f32.mrb[0].mxu0
    %v415 = vadd.f32 %v311, %v414
    %v416 = vpop.f32.mrb[0].mxu0
    %417 = vdwg.mxu0
    %418 = vmatprep.subr.mxu0 0.0
    %v419 = vand.u32 %v56, 4294901760
    %420 = vmatpush1.msra.mxu0 %v419
    %421 = vmatprep.subr.mxu0 0.0
    %v422 = vand.u32 %v57, 4294901760
    %423 = vmatpush1.msra.mxu0 %v422
    %424 = vmatprep.subr.mxu0 0.0
    %v425 = vand.u32 %v58, 4294901760
    %426 = vmatpush1.msra.mxu0 %v425
    %427 = vmatprep.subr.mxu0 0.0
    %v428 = vand.u32 %v59, 4294901760
    %429 = vmatpush1.msra.mxu0 %v428
    %430 = vmatprep.subr.mxu0 0.0
    %v431 = vand.u32 %v60, 4294901760
    %432 = vmatpush1.msra.mxu0 %v431
    %433 = vmatprep.subr.mxu0 0.0
    %v434 = vand.u32 %v61, 4294901760
    %435 = vmatpush1.msra.mxu0 %v434
    %436 = vmatprep.subr.mxu0 0.0
    %v437 = vand.u32 %v62, 4294901760
    %438 = vmatpush1.msra.mxu0 %v437
    %439 = vmatprep.subr.mxu0 0.0
    %v440 = vand.u32 %v63, 4294901760
    %441 = vmatpush1.msra.mxu0 %v440
    %442 = vmatprep.subr.mxu0 0.0
    %v443 = vand.u32 %v64, 4294901760
    %444 = vmatpush1.msra.mxu0 %v443
    %445 = vmatprep.subr.mxu0 0.0
    %v446 = vand.u32 %v65, 4294901760
    %447 = vmatpush1.msra.mxu0 %v446
    %448 = vmatprep.subr.mxu0 0.0
    %v449 = vand.u32 %v66, 4294901760
    %450 = vmatpush1.msra.mxu0 %v449
    %451 = vmatprep.subr.mxu0 0.0
    %v452 = vand.u32 %v67, 4294901760
    %453 = vmatpush1.msra.mxu0 %v452
    %454 = vmatprep.subr.mxu0 0.0
    %v455 = vand.u32 %v68, 4294901760
    %456 = vmatpush1.msra.mxu0 %v455
    %457 = vmatprep.subr.mxu0 0.0
    %v458 = vand.u32 %v69, 4294901760
    %459 = vmatpush1.msra.mxu0 %v458
    %460 = vmatprep.subr.mxu0 0.0
    %v461 = vand.u32 %v70, 4294901760
    %462 = vmatpush1.msra.mxu0 %v461
    %463 = vmatprep.subr.mxu0 0.0
    %v464 = vand.u32 %v71, 4294901760
    %465 = vmatpush1.msra.mxu0 %v464
    %466 = vmatprep.subr.mxu0 0.0
    %467 = vmatpush1.msra.mxu0 0.0
    %468 = vmatprep.subr.mxu0 0.0
    %469 = vmatpush1.msra.mxu0 0.0
    %470 = vmatprep.subr.mxu0 0.0
    %471 = vmatpush1.msra.mxu0 0.0
    %472 = vmatprep.subr.mxu0 0.0
    %473 = vmatpush1.msra.mxu0 0.0
    %474 = vmatprep.subr.mxu0 0.0
    %475 = vmatpush1.msra.mxu0 0.0
    %476 = vmatprep.subr.mxu0 0.0
    %477 = vmatpush1.msra.mxu0 0.0
    %478 = vmatprep.subr.mxu0 0.0
    %479 = vmatpush1.msra.mxu0 0.0
    %480 = vmatprep.subr.mxu0 0.0
    %481 = vmatpush1.msra.mxu0 0.0
    %482 = vmatprep.subr.mxu0 0.0
    %483 = vmatpush1.msra.mxu0 0.0
    %484 = vmatprep.subr.mxu0 0.0
    %485 = vmatpush1.msra.mxu0 0.0
    %486 = vmatprep.subr.mxu0 0.0
    %487 = vmatpush1.msra.mxu0 0.0
    %488 = vmatprep.subr.mxu0 0.0
    %489 = vmatpush1.msra.mxu0 0.0
    %490 = vmatprep.subr.mxu0 0.0
    %491 = vmatpush1.msra.mxu0 0.0
    %492 = vmatprep.subr.mxu0 0.0
    %493 = vmatpush1.msra.mxu0 0.0
    %494 = vmatprep.subr.mxu0 0.0
    %495 = vmatpush1.msra.mxu0 0.0
    %496 = vmatprep.subr.mxu0 0.0
    %497 = vmatpush1.msra.mxu0 0.0
    %498 = vmatprep.mubr.f32.mxu0 0.0
    %v499 = vand.u32 %v55, 4294901760
    %v500 = vsub.f32 %v55, %v499
    %v501 = vand.u32 %v500, 4294901760
    %502 = vmatmul.mubr.f32.gmra.mrb[0].mxu0 %v501
    %v503 = vpop.f32.mrb[0].mxu0
    %v504 = vadd.f32 %v415, %v503
    %v505 = vpop.f32.mrb[0].mxu0
    %506 = vdwg.mxu0
    %507 = vmatprep.subr.mxu0 0.0
    %v508 = vand.u32 %v56, 4294901760
    %v509 = vsub.f32 %v56, %v508
    %v510 = vand.u32 %v509, 4294901760
    %511 = vmatpush1.msra.mxu0 %v510
    %512 = vmatprep.subr.mxu0 0.0
    %v513 = vand.u32 %v57, 4294901760
    %v514 = vsub.f32 %v57, %v513
    %v515 = vand.u32 %v514, 4294901760
    %516 = vmatpush1.msra.mxu0 %v515
    %517 = vmatprep.subr.mxu0 0.0
    %v518 = vand.u32 %v58, 4294901760
    %v519 = vsub.f32 %v58, %v518
    %v520 = vand.u32 %v519, 4294901760
    %521 = vmatpush1.msra.mxu0 %v520
    %522 = vmatprep.subr.mxu0 0.0
    %v523 = vand.u32 %v59, 4294901760
    %v524 = vsub.f32 %v59, %v523
    %v525 = vand.u32 %v524, 4294901760
    %526 = vmatpush1.msra.mxu0 %v525
    %527 = vmatprep.subr.mxu0 0.0
    %v528 = vand.u32 %v60, 4294901760
    %v529 = vsub.f32 %v60, %v528
    %v530 = vand.u32 %v529, 4294901760
    %531 = vmatpush1.msra.mxu0 %v530
    %532 = vmatprep.subr.mxu0 0.0
    %v533 = vand.u32 %v61, 4294901760
    %v534 = vsub.f32 %v61, %v533
    %v535 = vand.u32 %v534, 4294901760
    %536 = vmatpush1.msra.mxu0 %v535
    %537 = vmatprep.subr.mxu0 0.0
    %v538 = vand.u32 %v62, 4294901760
    %v539 = vsub.f32 %v62, %v538
    %v540 = vand.u32 %v539, 4294901760
    %541 = vmatpush1.msra.mxu0 %v540
    %542 = vmatprep.subr.mxu0 0.0
    %v543 = vand.u32 %v63, 4294901760
    %v544 = vsub.f32 %v63, %v543
    %v545 = vand.u32 %v544, 4294901760
    %546 = vmatpush1.msra.mxu0 %v545
    %547 = vmatprep.subr.mxu0 0.0
    %v548 = vand.u32 %v64, 4294901760
    %v549 = vsub.f32 %v64, %v548
    %v550 = vand.u32 %v549, 4294901760
    %551 = vmatpush1.msra.mxu0 %v550
    %552 = vmatprep.subr.mxu0 0.0
    %v553 = vand.u32 %v65, 4294901760
    %v554 = vsub.f32 %v65, %v553
    %v555 = vand.u32 %v554, 4294901760
    %556 = vmatpush1.msra.mxu0 %v555
    %557 = vmatprep.subr.mxu0 0.0
    %v558 = vand.u32 %v66, 4294901760
    %v559 = vsub.f32 %v66, %v558
    %v560 = vand.u32 %v559, 4294901760
    %561 = vmatpush1.msra.mxu0 %v560
    %562 = vmatprep.subr.mxu0 0.0
    %v563 = vand.u32 %v67, 4294901760
    %v564 = vsub.f32 %v67, %v563
    %v565 = vand.u32 %v564, 4294901760
    %566 = vmatpush1.msra.mxu0 %v565
    %567 = vmatprep.subr.mxu0 0.0
    %v568 = vand.u32 %v68, 4294901760
    %v569 = vsub.f32 %v68, %v568
    %v570 = vand.u32 %v569, 4294901760
    %571 = vmatpush1.msra.mxu0 %v570
    %572 = vmatprep.subr.mxu0 0.0
    %v573 = vand.u32 %v69, 4294901760
    %v574 = vsub.f32 %v69, %v573
    %v575 = vand.u32 %v574, 4294901760
    %576 = vmatpush1.msra.mxu0 %v575
    %577 = vmatprep.subr.mxu0 0.0
    %v578 = vand.u32 %v70, 4294901760
    %v579 = vsub.f32 %v70, %v578
    %v580 = vand.u32 %v579, 4294901760
    %581 = vmatpush1.msra.mxu0 %v580
    %582 = vmatprep.subr.mxu0 0.0
    %v583 = vand.u32 %v71, 4294901760
    %v584 = vsub.f32 %v71, %v583
    %v585 = vand.u32 %v584, 4294901760
    %586 = vmatpush1.msra.mxu0 %v585
    %587 = vmatprep.subr.mxu0 0.0
    %588 = vmatpush1.msra.mxu0 0.0
    %589 = vmatprep.subr.mxu0 0.0
    %590 = vmatpush1.msra.mxu0 0.0
    %591 = vmatprep.subr.mxu0 0.0
    %592 = vmatpush1.msra.mxu0 0.0
    %593 = vmatprep.subr.mxu0 0.0
    %594 = vmatpush1.msra.mxu0 0.0
    %595 = vmatprep.subr.mxu0 0.0
    %596 = vmatpush1.msra.mxu0 0.0
    %597 = vmatprep.subr.mxu0 0.0
    %598 = vmatpush1.msra.mxu0 0.0
    %599 = vmatprep.subr.mxu0 0.0
    %600 = vmatpush1.msra.mxu0 0.0
    %601 = vmatprep.subr.mxu0 0.0
    %602 = vmatpush1.msra.mxu0 0.0
    %603 = vmatprep.subr.mxu0 0.0
    %604 = vmatpush1.msra.mxu0 0.0
    %605 = vmatprep.subr.mxu0 0.0
    %606 = vmatpush1.msra.mxu0 0.0
    %607 = vmatprep.subr.mxu0 0.0
    %608 = vmatpush1.msra.mxu0 0.0
    %609 = vmatprep.subr.mxu0 0.0
    %610 = vmatpush1.msra.mxu0 0.0
    %611 = vmatprep.subr.mxu0 0.0
    %612 = vmatpush1.msra.mxu0 0.0
    %613 = vmatprep.subr.mxu0 0.0
    %614 = vmatpush1.msra.mxu0 0.0
    %615 = vmatprep.subr.mxu0 0.0
    %616 = vmatpush1.msra.mxu0 0.0
    %617 = vmatprep.subr.mxu0 0.0
    %618 = vmatpush1.msra.mxu0 0.0
    %619 = vmatprep.mubr.f32.mxu0 0.0
    %v620 = vand.u32 %v55, 4294901760
    %621 = vmatmul.mubr.f32.gmra.mrb[0].mxu0 %v620
    %v622 = vpop.f32.mrb[0].mxu0
    %v623 = vadd.f32 %v504, %v622
    %v624 = vpop.f32.mrb[0].mxu0
    %625 = vdwg.mxu0
    %626 = vmatprep.subr.mxu0 0.0
    %v627 = vand.u32 %v56, 4294901760
    %628 = vmatpush1.msra.mxu0 %v627
    %629 = vmatprep.subr.mxu0 0.0
    %v630 = vand.u32 %v57, 4294901760
    %631 = vmatpush1.msra.mxu0 %v630
    %632 = vmatprep.subr.mxu0 0.0
    %v633 = vand.u32 %v58, 4294901760
    %634 = vmatpush1.msra.mxu0 %v633
    %635 = vmatprep.subr.mxu0 0.0
    %v636 = vand.u32 %v59, 4294901760
    %637 = vmatpush1.msra.mxu0 %v636
    %638 = vmatprep.subr.mxu0 0.0
    %v639 = vand.u32 %v60, 4294901760
    %640 = vmatpush1.msra.mxu0 %v639
    %641 = vmatprep.subr.mxu0 0.0
    %v642 = vand.u32 %v61, 4294901760
    %643 = vmatpush1.msra.mxu0 %v642
    %644 = vmatprep.subr.mxu0 0.0
    %v645 = vand.u32 %v62, 4294901760
    %646 = vmatpush1.msra.mxu0 %v645
    %647 = vmatprep.subr.mxu0 0.0
    %v648 = vand.u32 %v63, 4294901760
    %649 = vmatpush1.msra.mxu0 %v648
    %650 = vmatprep.subr.mxu0 0.0
    %v651 = vand.u32 %v64, 4294901760
    %652 = vmatpush1.msra.mxu0 %v651
    %653 = vmatprep.subr.mxu0 0.0
    %v654 = vand.u32 %v65, 4294901760
    %655 = vmatpush1.msra.mxu0 %v654
    %656 = vmatprep.subr.mxu0 0.0
    %v657 = vand.u32 %v66, 4294901760
    %658 = vmatpush1.msra.mxu0 %v657
    %659 = vmatprep.subr.mxu0 0.0
    %v660 = vand.u32 %v67, 4294901760
    %661 = vmatpush1.msra.mxu0 %v660
    %662 = vmatprep.subr.mxu0 0.0
    %v663 = vand.u32 %v68, 4294901760
    %664 = vmatpush1.msra.mxu0 %v663
    %665 = vmatprep.subr.mxu0 0.0
    %v666 = vand.u32 %v69, 4294901760
    %667 = vmatpush1.msra.mxu0 %v666
    %668 = vmatprep.subr.mxu0 0.0
    %v669 = vand.u32 %v70, 4294901760
    %670 = vmatpush1.msra.mxu0 %v669
    %671 = vmatprep.subr.mxu0 0.0
    %v672 = vand.u32 %v71, 4294901760
    %673 = vmatpush1.msra.mxu0 %v672
    %674 = vmatprep.subr.mxu0 0.0
    %675 = vmatpush1.msra.mxu0 0.0
    %676 = vmatprep.subr.mxu0 0.0
    %677 = vmatpush1.msra.mxu0 0.0
    %678 = vmatprep.subr.mxu0 0.0
    %679 = vmatpush1.msra.mxu0 0.0
    %680 = vmatprep.subr.mxu0 0.0
    %681 = vmatpush1.msra.mxu0 0.0
    %682 = vmatprep.subr.mxu0 0.0
    %683 = vmatpush1.msra.mxu0 0.0
    %684 = vmatprep.subr.mxu0 0.0
    %685 = vmatpush1.msra.mxu0 0.0
    %686 = vmatprep.subr.mxu0 0.0
    %687 = vmatpush1.msra.mxu0 0.0
    %688 = vmatprep.subr.mxu0 0.0
    %689 = vmatpush1.msra.mxu0 0.0
    %690 = vmatprep.subr.mxu0 0.0
    %691 = vmatpush1.msra.mxu0 0.0
    %692 = vmatprep.subr.mxu0 0.0
    %693 = vmatpush1.msra.mxu0 0.0
    %694 = vmatprep.subr.mxu0 0.0
    %695 = vmatpush1.msra.mxu0 0.0
    %696 = vmatprep.subr.mxu0 0.0
    %697 = vmatpush1.msra.mxu0 0.0
    %698 = vmatprep.subr.mxu0 0.0
    %699 = vmatpush1.msra.mxu0 0.0
    %700 = vmatprep.subr.mxu0 0.0
    %701 = vmatpush1.msra.mxu0 0.0
    %702 = vmatprep.subr.mxu0 0.0
    %703 = vmatpush1.msra.mxu0 0.0
    %704 = vmatprep.subr.mxu0 0.0
    %705 = vmatpush1.msra.mxu0 0.0
    %706 = vmatprep.mubr.f32.mxu0 0.0
    %v707 = vand.u32 %v55, 4294901760
    %708 = vmatmul.mubr.f32.gmra.mrb[0].mxu0 %v707
    %v709 = vpop.f32.mrb[0].mxu0
    %v710 = vadd.f32 %v623, %v709
    %v711 = vpop.f32.mrb[0].mxu0
    %712 = vdwg.mxu0
    %v713 = vrsqrt.pop %v710
    %v714 = vmul.f32 %v54, %v713
    %v715 = vld [vmem:[#allocation5] sm:$0x1]
    %v717 = vlaneseq
    %v718 = vshrl.u32 %v717, 7
    %v719 = vsub.s32 0, %v718
    %v720 = vrot.slane %v715, %v719
    %v722 = vmul.f32 %v714, %v720
    %723 = vst [vmem:[#allocation8] sm:$0xff] %v722
    // Predicated region
    $region26: #{_rms_norm_impl.1} parent=1 // pred_check
      _
    $region27: #{_rms_norm_impl.1} parent=1 // pred_check_branch
      %725 = sbr.rel (0) target = $region29
    $region28: #{_rms_norm_impl.1} parent=1 // pred_region
      %s727 = ssub.s32 128, 64
      %728 = vsyncadd [#allocation4], %s727
      %s729 = sshll.u32 [#allocation8], 4
      %s730 = int_to_ptr.vmem [resolvable:$true] %s729
      %735 = dma.vmem_to_hbm [thread:$0]  %s730, 64, %s3, [#allocation4], 64, 64, 4
    $region29: #{_rms_norm_impl.1} parent=1 // pred_fallthru
      _
    // Predicated region
    $region30: #{_rms_norm_impl.1} parent=1 // pred_check
      _
    $region31: #{_rms_norm_impl.1} parent=1 // pred_check_branch
      %737 = sbr.rel (0) target = $region33
    $region32: #{_rms_norm_impl.1} parent=1 // pred_region
      %738 = dma.done [#allocation4], 128
    $region33: #{_rms_norm_impl.1} parent=1 // pred_fallthru
      _
    %739 = vsyncpa [#allocation3], 1
    %740 = vsyncpa [#allocation6], 1
    %741 = vsyncpa [#allocation4], 1

</llo_original>
